<compile_context>
chip_gen: v5e
topology: v5e:2x2
jax: 0.10.0
libtpu: 0.0.40
codegen_flags: <defaults>
</compile_context>

<pallas_src>
import functools

import jax
import jax.numpy as jnp
from jax.experimental import pallas as pl
from jax.experimental.pallas import tpu as pltpu


# -----------------------------------------------------------------------------
# Kernels
# -----------------------------------------------------------------------------

def _norm_kernel(x_ref, alpha_ref, bias_ref, o_ref, *, eps):
    """Single-pass row norm: the whole feature dim is resident in the tile."""
    x = x_ref[...].astype(jnp.float32)                 # (tile_rows, d)
    d = x.shape[-1]
    mean = jnp.mean(x, axis=-1, keepdims=True)
    xc = x - mean
    # torch.std default is the unbiased estimator (ddof=1), eps added to std.
    # NOTE: d_model == 1 divides by zero (NaN), matching torch.
    var = jnp.sum(xc * xc, axis=-1, keepdims=True) * jnp.float32(1.0 / (d - 1))
    std = jnp.sqrt(var)
    # Per-row reciprocal (tile_rows, 1) then multiply; approx=False keeps
    # 1e-5 parity with the reference.
    inv = pl.reciprocal(std + jnp.float32(eps), approx=False)
    alpha = alpha_ref[...]                             # (1, d), pre-cast f32
    bias = bias_ref[...]                               # (1, d), pre-cast f32
    o_ref[...] = (alpha * (xc * inv) + bias).astype(o_ref.dtype)


def _stats_kernel(x_ref, sum_ref, sumsq_ref):
    """Wide-d pass 1: per-row sum and sum-of-squares, feature axis tiled."""
    @pl.when(pl.program_id(1) == 0)
    def _():
        sum_ref[...] = jnp.zeros_like(sum_ref)
        sumsq_ref[...] = jnp.zeros_like(sumsq_ref)
    x = x_ref[...].astype(jnp.float32)                 # (tile_rows, tile_d)
    sum_ref[...] += jnp.sum(x, axis=-1, keepdims=True)
    sumsq_ref[...] += jnp.sum(x * x, axis=-1, keepdims=True)


def _apply_kernel(x_ref, sum_ref, sumsq_ref, alpha_ref, bias_ref, o_ref, *,
                  eps, d):
    """Wide-d pass 2: normalize each feature tile using the pass-1 stats."""
    x = x_ref[...].astype(jnp.float32)                 # (tile_rows, tile_d)
    mean = sum_ref[...] * jnp.float32(1.0 / d)
    # Unbiased variance via E[x^2] - mean^2 (clamped against rounding).  This
    # one-pass form is only used on the (rare) very-wide-d fallback path.
    var = (sumsq_ref[...] - jnp.float32(d) * mean * mean)
    var = jnp.maximum(var * jnp.float32(1.0 / (d - 1)), jnp.float32(0.0))
    inv = pl.reciprocal(jnp.sqrt(var) + jnp.float32(eps), approx=False)
    o_ref[...] = (alpha_ref[...] * ((x - mean) * inv)
                  + bias_ref[...]).astype(o_ref.dtype)


# -----------------------------------------------------------------------------
# Host-side wrapper
# -----------------------------------------------------------------------------

def _sublane_multiple(dtype) -> int:
    # 8 rows per sublane tile for 4-byte dtypes, 16 for 2-byte, 32 for 1-byte.
    itemsize = jnp.dtype(dtype).itemsize
    return max(8, 32 // itemsize)


def _vmem_capacity_bytes(default=64 * 1024 * 1024) -> int:
    """Physical VMEM per TensorCore; conservative 64 MiB (v7x) fallback."""
    try:
        info = pltpu.get_tpu_info()
        cap = int(getattr(info, "vmem_capacity_bytes", 0) or 0)
        if cap > 0:
            return cap
    except Exception:
        pass
    return default


def norm_pallas(x, alpha, bias, eps=1e-6, *, tile_rows=None, tile_d=None,
                wide=None, vmem_limit_bytes=None):
    """x: [..., d_model]; alpha, bias: [d_model]."""
    orig_shape = x.shape
    d = int(orig_shape[-1])
    x2 = x.reshape(-1, d)
    rows = x2.shape[0]
    itemsize = jnp.dtype(x.dtype).itemsize
    sublane = _sublane_multiple(x.dtype)
    rows_up = ((rows + sublane - 1) // sublane) * sublane

    cap = _vmem_capacity_bytes()
    # Live VMEM per tiled row for the single-pass kernel: double-buffered
    # input + double-buffered output + ~3 f32 intermediates from the upcast.
    live_per_row = d * (4 * itemsize + 12)
    # Spend roughly half the VMEM on the pipelined working set:
    #   ~64 MiB on 128 MiB parts (v5e/v6e)  -> ~8-9 MiB f32 input buffers
    #   ~32 MiB on 64 MiB-per-TC v7x        -> ~4-5 MiB f32 input buffers
    total_budget = min(cap // 2, 64 * 1024 * 1024)

    # Scale/shift pre-cast to f32 once (fetched once via constant index_map).
    alpha2 = alpha.astype(jnp.float32).reshape(1, d)
    bias2 = bias.astype(jnp.float32).reshape(1, d)
    param_bytes = 2 * d * 4

    if wide is None:
        # Wide path only when even one sublane of rows blows the budget and
        # the feature axis can be tiled in 128-lane chunks.
        wide = (sublane * live_per_row > total_budget) and (d % 128 == 0)

    # ---------------------- fast path: feature dim resident -----------------
    if not wide:
        if tile_rows is None:
            tile_rows = total_budget // max(1, live_per_row)
        tile_rows = max(sublane, (int(tile_rows) // sublane) * sublane)
        tile_rows = min(tile_rows, rows_up)

        if vmem_limit_bytes is None:
            needed = tile_rows * live_per_row + param_bytes + (4 << 20)
            vmem_limit_bytes = max(32 << 20, min(needed, cap - (8 << 20)))

        out = pl.pallas_call(
            functools.partial(_norm_kernel, eps=eps),
            out_shape=jax.ShapeDtypeStruct((rows, d), x.dtype),
            grid_spec=pltpu.PrefetchScalarGridSpec(
                num_scalar_prefetch=0,
                grid=(pl.cdiv(rows, tile_rows),),
                in_specs=[
                    pl.BlockSpec((tile_rows, d), lambda i: (i, 0)),
                    pl.BlockSpec((1, d), lambda i: (0, 0)),
                    pl.BlockSpec((1, d), lambda i: (0, 0)),
                ],
                out_specs=pl.BlockSpec((tile_rows, d), lambda i: (i, 0)),
            ),
            compiler_params=pltpu.CompilerParams(
                # Row tiles are independent -> megacore sharding on v7x.
                dimension_semantics=("parallel",),
                vmem_limit_bytes=int(vmem_limit_bytes)),
        )(x2, alpha2, bias2)
        return out.reshape(orig_shape)

    # ---------------------- wide-d fallback: two feature-tiled passes -------
    if d % 128 != 0:
        # TODO(synk): feature-tiled path requires d % 128 == 0; fall back to
        # the single-pass kernel with the minimum row tile.
        return norm_pallas(x, alpha, bias, eps, tile_rows=sublane, wide=False)

    if tile_rows is None:
        tile_rows = min(rows_up, 256)
    tile_rows = max(sublane, (int(tile_rows) // sublane) * sublane)
    tile_rows = min(tile_rows, rows_up)

    if tile_d is None:
        # Largest multiple of 128 that divides d and keeps the working set
        # within budget.
        max_d = max(128, (total_budget // (tile_rows * (4 * itemsize + 12)))
                    // 128 * 128)
        tile_d = 128
        t = 128
        while t <= min(d, max_d):
            if d % t == 0:
                tile_d = t
            t += 128
    assert d % tile_d == 0 and tile_d % 128 == 0

    grid = (pl.cdiv(rows, tile_rows), d // tile_d)
    if vmem_limit_bytes is None:
        needed = tile_rows * tile_d * (4 * itemsize + 12) + param_bytes + (4 << 20)
        vmem_limit_bytes = max(32 << 20, min(needed, cap - (8 << 20)))
    compiler_params_stats = pltpu.CompilerParams(
        dimension_semantics=("parallel", "arbitrary"),
        vmem_limit_bytes=int(vmem_limit_bytes))
    compiler_params_apply = pltpu.CompilerParams(
        dimension_semantics=("parallel", "parallel"),
        vmem_limit_bytes=int(vmem_limit_bytes))

    # Pass 1: per-row sum and sum-of-squares (resident accumulator outputs
    # across the reduction axis, init/finalize via pl.when).
    sums, sumsqs = pl.pallas_call(
        _stats_kernel,
        out_shape=(jax.ShapeDtypeStruct((rows, 1), jnp.float32),
                   jax.ShapeDtypeStruct((rows, 1), jnp.float32)),
        grid_spec=pltpu.PrefetchScalarGridSpec(
            num_scalar_prefetch=0,
            grid=grid,
            in_specs=[pl.BlockSpec((tile_rows, tile_d), lambda i, k: (i, k))],
            out_specs=(pl.BlockSpec((tile_rows, 1), lambda i, k: (i, 0)),
                       pl.BlockSpec((tile_rows, 1), lambda i, k: (i, 0))),
        ),
        compiler_params=compiler_params_stats,
    )(x2)

    # Pass 2: elementwise normalize each (row, feature) tile.
    out = pl.pallas_call(
        functools.partial(_apply_kernel, eps=eps, d=d),
        out_shape=jax.ShapeDtypeStruct((rows, d), x.dtype),
        grid_spec=pltpu.PrefetchScalarGridSpec(
            num_scalar_prefetch=0,
            grid=grid,
            in_specs=[
                pl.BlockSpec((tile_rows, tile_d), lambda i, k: (i, k)),
                pl.BlockSpec((tile_rows, 1), lambda i, k: (i, 0)),
                pl.BlockSpec((tile_rows, 1), lambda i, k: (i, 0)),
                pl.BlockSpec((1, tile_d), lambda i, k: (0, k)),
                pl.BlockSpec((1, tile_d), lambda i, k: (0, k)),
            ],
            out_specs=pl.BlockSpec((tile_rows, tile_d), lambda i, k: (i, k)),
        ),
        compiler_params=compiler_params_apply,
    )(x2, sums, sumsqs, alpha2, bias2)
    return out.reshape(orig_shape)


def norm_reference(x, alpha, bias, eps=1e-6):
    xf = x.astype(jnp.float32)
    mean = jnp.mean(xf, axis=-1, keepdims=True)
    xc = xf - mean
    d = xf.shape[-1]
    var = jnp.sum(xc * xc, axis=-1, keepdims=True) / (d - 1)
    std = jnp.sqrt(var)
    return (alpha * xc / (std + eps) + bias).astype(x.dtype)


if __name__ == "__main__":
    key = jax.random.PRNGKey(0)
    batch, seq, d_model = 2, 8, 32
    x = jax.random.normal(key, (batch, seq, d_model), dtype=jnp.float32)

    # Deterministic parameter init matching nn.Parameter(ones/zeros(d_model)).
    alpha = jnp.ones((d_model,), dtype=jnp.float32)
    bias = jnp.zeros((d_model,), dtype=jnp.float32)

    out = jax.block_until_ready(norm_pallas(x, alpha, bias, eps=1e-6))
    ref = norm_reference(x, alpha, bias, eps=1e-6)
    assert out.shape == x.shape
    assert jnp.allclose(out, ref, atol=1e-5, rtol=1e-5), "mismatch vs reference"

    # Ragged row count (rows not a multiple of tile_rows): masked last block.
    x_r = jax.random.normal(jax.random.PRNGKey(1), (2, 5, d_model),
                            dtype=jnp.float32)
    out_r = jax.block_until_ready(norm_pallas(x_r, alpha, bias, eps=1e-6))
    ref_r = norm_reference(x_r, alpha, bias, eps=1e-6)
    assert jnp.allclose(out_r, ref_r, atol=1e-5, rtol=1e-5), "ragged mismatch"

    # Force the wide-d (feature-tiled, two-pass) path at a small shape so it
    # is compiled and validated on TPU: d=256 with tile_d=128 -> 2 feature
    # steps exercising the accumulator init/finalize.
    d_w = 256
    x_w = jax.random.normal(jax.random.PRNGKey(2), (16, d_w), dtype=jnp.float32)
    alpha_w = jnp.ones((d_w,), dtype=jnp.float32)
    bias_w = jnp.zeros((d_w,), dtype=jnp.float32)
    out_w = jax.block_until_ready(
        norm_pallas(x_w, alpha_w, bias_w, eps=1e-6,
                    wide=True, tile_rows=16, tile_d=128))
    ref_w = norm_reference(x_w, alpha_w, bias_w, eps=1e-6)
    assert jnp.allclose(out_w, ref_w, atol=1e-5, rtol=1e-5), "wide mismatch"

    print("KERNEL_OK")
</pallas_src>

<mosaic_0001>
module attributes {stable_mosaic.version = 11 : i64} {
  func.func @_norm_kernel(%arg0: i32, %arg1: memref<16x32xf32, #tpu.memory_space<vmem>>, %arg2: memref<1x32xf32, #tpu.memory_space<vmem>>, %arg3: memref<1x32xf32, #tpu.memory_space<vmem>>, %arg4: memref<16x32xf32, #tpu.memory_space<vmem>>) attributes {dimension_semantics = [#tpu.dimension_semantics<parallel>], iteration_bounds = array<i64: 1>, scalar_prefetch = 0 : i64, scratch_operands = 0 : i64, tpu.core_type = #tpu.core_type<tc>, window_params = [{transform_indices = @transform_0, window_bounds = array<i64: 16, 32>}, {pipeline_mode = #tpu.pipeline_mode<synchronous>, transform_indices = @transform_1, window_bounds = array<i64: 1, 32>}, {pipeline_mode = #tpu.pipeline_mode<synchronous>, transform_indices = @transform_2, window_bounds = array<i64: 1, 32>}, {transform_indices = @transform_3, window_bounds = array<i64: 16, 32>}]} {
    %c0 = arith.constant 0 : index
    %c0_0 = arith.constant 0 : index
    %0 = vector.load %arg1[%c0, %c0_0] : memref<16x32xf32, #tpu.memory_space<vmem>>, vector<16x32xf32>
    %cst = arith.constant dense<0.000000e+00> : vector<16xf32>
    %1 = vector.multi_reduction <add>, %0, %cst [1] : vector<16x32xf32> to vector<16xf32>
    %2 = vector.shape_cast %1 : vector<16xf32> to vector<16x1xf32>
    %cst_1 = arith.constant 3.200000e+01 : f32
    %3 = vector.broadcast %cst_1 : f32 to vector<16x1xf32>
    %4 = arith.divf %2, %3 : vector<16x1xf32>
    %5 = vector.broadcast %4 : vector<16x1xf32> to vector<16x32xf32>
    %6 = arith.subf %0, %5 : vector<16x32xf32>
    %7 = arith.mulf %6, %6 : vector<16x32xf32>
    %cst_2 = arith.constant dense<0.000000e+00> : vector<16xf32>
    %8 = vector.multi_reduction <add>, %7, %cst_2 [1] : vector<16x32xf32> to vector<16xf32>
    %9 = vector.shape_cast %8 : vector<16xf32> to vector<16x1xf32>
    %cst_3 = arith.constant 0.0322580636 : f32
    %10 = vector.broadcast %cst_3 : f32 to vector<16x1xf32>
    %11 = arith.mulf %9, %10 : vector<16x1xf32>
    %12 = math.sqrt %11 : vector<16x1xf32>
    %cst_4 = arith.constant 9.99999997E-7 : f32
    %13 = vector.broadcast %cst_4 : f32 to vector<16x1xf32>
    %14 = arith.addf %12, %13 : vector<16x1xf32>
    %15 = tpu.reciprocal %14 : vector<16x1xf32> -> vector<16x1xf32>
    %c0_5 = arith.constant 0 : index
    %c0_6 = arith.constant 0 : index
    %16 = vector.load %arg2[%c0_5, %c0_6] : memref<1x32xf32, #tpu.memory_space<vmem>>, vector<1x32xf32>
    %c0_7 = arith.constant 0 : index
    %c0_8 = arith.constant 0 : index
    %17 = vector.load %arg3[%c0_7, %c0_8] : memref<1x32xf32, #tpu.memory_space<vmem>>, vector<1x32xf32>
    %18 = vector.broadcast %15 : vector<16x1xf32> to vector<16x32xf32>
    %19 = arith.mulf %6, %18 : vector<16x32xf32>
    %20 = vector.broadcast %16 : vector<1x32xf32> to vector<16x32xf32>
    %21 = arith.mulf %20, %19 : vector<16x32xf32>
    %22 = vector.broadcast %17 : vector<1x32xf32> to vector<16x32xf32>
    %23 = arith.addf %21, %22 : vector<16x32xf32>
    %c0_9 = arith.constant 0 : index
    %c0_10 = arith.constant 0 : index
    %24 = vector.load %arg4[%c0_9, %c0_10] : memref<16x32xf32, #tpu.memory_space<vmem>>, vector<16x32xf32>
    tpu.vector_store %arg4[%c0_9, %c0_10], %23 {strides = array<i32>} : memref<16x32xf32, #tpu.memory_space<vmem>>, vector<16x32xf32>,
    return
  }
  func.func @transform_0(%arg0: i32) -> (i32, i32) {
    %c0_i32 = arith.constant 0 : i32
    %c0_i32_0 = arith.constant 0 : i32
    return %arg0, %c0_i32 : i32, i32
  }
  func.func @transform_1(%arg0: i32) -> (i32, i32) {
    %c0_i32 = arith.constant 0 : i32
    %c0_i32_0 = arith.constant 0 : i32
    %c0_i32_1 = arith.constant 0 : i32
    return %c0_i32, %c0_i32_0 : i32, i32
  }
  func.func @transform_2(%arg0: i32) -> (i32, i32) {
    %c0_i32 = arith.constant 0 : i32
    %c0_i32_0 = arith.constant 0 : i32
    %c0_i32_1 = arith.constant 0 : i32
    return %c0_i32, %c0_i32_0 : i32, i32
  }
  func.func @transform_3(%arg0: i32) -> (i32, i32) {
    %c0_i32 = arith.constant 0 : i32
    %c0_i32_0 = arith.constant 0 : i32
    return %arg0, %c0_i32 : i32, i32
  }
}

</mosaic_0001>

<llo_original>
// kernel: tpu_custom_call.1
$region0: #{tpu_custom_call.1}
  #allocation0 [shape = 'u32[]', space=smem, size = 0x4, offset = 0x4, fixed_abs, tag = 'smem constant byte address 0x4 - core index']
  #allocation1 [shape = 'u32[72,128]{1,0:T(1,128)}', space=vmem, size = 0x9000, scoped, tag = 'internal scratch']
  %s0 = inlined_call_operand.hbm [shape: f32[16,32], index: 0, kind: input, shape index: {}]
  %s1 = inlined_call_operand.hbm [shape: f32[1,32], index: 1, kind: input, shape index: {}]
  %s2 = inlined_call_operand.vmem [shape: f32[1,32], index: 2, kind: input, shape index: {}]
  %s3 = inlined_call_operand.hbm [shape: f32[16,32], index: 3, kind: output, shape index: {}]
  %s4 = sld [smem:[#allocation0]]
  $region30: #{tpu_custom_call.1} parent=0
    _
  %s6 = ssub.s32 1, %s4
  %s7 = scalar_select 0, %s6, %s4
  $region1: #{tpu_custom_call.1} parent=0
    #allocation2 [shape = 'u8[8192]{0}', space=vmem, size = 0x2000, scoped, tag = 'input window, operand 0, single buffered']
    #allocation3 [shape = 's32[1]{0}', space=sflag, size = 0x4, scoped, tag = 'scoped memory for tpu_custom_call.1']
    #allocation4 [shape = 's32[1]{0}', space=sflag, size = 0x4, scoped, tag = 'scoped memory for tpu_custom_call.1']
    #allocation5 [shape = 'u8[512]{0}', space=vmem, size = 0x400, scoped, tag = 'input window, operand 1, single buffered']
    #allocation6 [shape = 's32[1]{0}', space=sflag, size = 0x4, scoped, tag = 'scoped memory for tpu_custom_call.1']
    #allocation7 [shape = 'u8[8192]{0}', space=vmem, size = 0x2000, scoped, tag = 'output window, operand 0, single buffered']
    %8 = vsyncpa [#allocation3], 0
    %9 = vsyncpa [#allocation6], 0
    %10 = vsyncpa [#allocation4], 0
    // Predicated region
    $region2: #{tpu_custom_call.1} parent=1 // pred_check
      _
    $region3: #{tpu_custom_call.1} parent=1 // pred_check_branch
      %12 = sbr.rel (0) target = $region5
    $region4: #{tpu_custom_call.1} parent=1 // pred_region
      %14 = vsyncadd [#allocation3], 0
      %s15 = sshll.u32 %s0, 4
      %s16 = int_to_ptr.hbm [resolvable:$true] %s15
      %s17 = sshll.u32 [#allocation2], 4
      %s18 = int_to_ptr.vmem [resolvable:$true] %s17
      %23 = dma.hbm_to_vmem [thread:$0]  %s16, 256, %s18, [#allocation3], 128, 128, 8
    $region5: #{tpu_custom_call.1} parent=1 // pred_fallthru
      _
    // Predicated region
    $region6: #{tpu_custom_call.1} parent=1 // pred_check
      _
    $region7: #{tpu_custom_call.1} parent=1 // pred_check_branch
      %25 = sbr.rel (0) target = $region9
    $region8: #{tpu_custom_call.1} parent=1 // pred_region
      %27 = vsyncadd [#allocation6], 0
      %s29 = sshll.u32 %s1, 4
      %s30 = int_to_ptr.hbm [resolvable:$true] %s29
      %s31 = sshll.u32 [#allocation5], 4
      %s32 = int_to_ptr.vmem [resolvable:$true] %s31
      %34 = dma.hbm_to_vmem [thread:$0]  %s30, 16, %s32, [#allocation6]
    $region9: #{tpu_custom_call.1} parent=1 // pred_fallthru
      _
    // Predicated region
    $region10: #{tpu_custom_call.1} parent=1 // pred_check
      _
    $region11: #{tpu_custom_call.1} parent=1 // pred_check_branch
      %36 = sbr.rel (0) target = $region13
    $region12: #{tpu_custom_call.1} parent=1 // pred_region
      _
    $region13: #{tpu_custom_call.1} parent=1 // pred_fallthru
      _
    // Predicated region
    $region14: #{tpu_custom_call.1} parent=1 // pred_check
      _
    $region15: #{tpu_custom_call.1} parent=1 // pred_check_branch
      %38 = sbr.rel (0) target = $region17
    $region16: #{tpu_custom_call.1} parent=1 // pred_region
      %40 = dma.done [#allocation3], 256
    $region17: #{tpu_custom_call.1} parent=1 // pred_fallthru
      _
    // Predicated region
    $region18: #{tpu_custom_call.1} parent=1 // pred_check
      _
    $region19: #{tpu_custom_call.1} parent=1 // pred_check_branch
      %42 = sbr.rel (0) target = $region21
    $region20: #{tpu_custom_call.1} parent=1 // pred_region
      %44 = dma.done [#allocation6], 16
    $region21: #{tpu_custom_call.1} parent=1 // pred_fallthru
      _
    %v45 = vld [vmem:[#allocation2] sm:$0xff]
    %v46 = vld [vmem:[#allocation2 + $0x8] sm:$0xff]
    %vm47 = vcmask 261120
    %v48 = vsel %vm47, %v45, 0.0
    %49 = vadd.xlane.f32.xlu0 %v48
    %v50 = vpop.xlane.xlu0 %49
    %v51 = vsel %vm47, %v46, 0.0
    %52 = vadd.xlane.f32.xlu0 %v51
    %v53 = vpop.xlane.xlu0 %52
    %v54 = vrcp.pop 32.0
    %v55 = vmul.f32 32.0, %v54
    %v56 = vsub.f32 1.0, %v55
    %v57 = vmul.f32 %v54, %v56
    %v58 = vadd.f32 %v54, %v57
    %vm59 = vweird.f32 %v54
    %v60 = vsel %vm59, %v54, %v58
    %v61 = vmul.f32 %v50, %v60
    %v62 = vmul.f32 %v53, %v60
    %v63 = vsub.f32 %v45, %v61
    %v64 = vsub.f32 %v46, %v62
    %v65 = vmul.f32 %v63, %v63
    %v66 = vmul.f32 %v64, %v64
    %v67 = vsel %vm47, %v65, 0.0
    %68 = vadd.xlane.f32.xlu0 %v67
    %v69 = vpop.xlane.xlu0 %68
    %v70 = vsel %vm47, %v66, 0.0
    %71 = vadd.xlane.f32.xlu0 %v70
    %v72 = vpop.xlane.xlu0 %71
    %v73 = vmul.f32 %v69, 0.032258064
    %v74 = vmul.f32 %v72, 0.032258064
    %v75 = vrsqrt.pop %v73
    %v76 = vmul.f32 %v75, %v73
    %v77 = vmul.f32 %v76, %v75
    %v78 = vmul.f32 0.5, %v77
    %v79 = vsub.f32 1.5, %v78
    %v80 = vmul.f32 %v75, %v79
    %v81 = vmul.f32 %v73, %v80
    %vm82 = vcmp.eq.f32.partialorder %v73, inf
    %v83 = vsel %vm82, %v73, %v81
    %vm84 = vcmp.eq.f32.partialorder %v73, 0.0
    %v85 = vand.u32 %v73, 2147483648
    %v86 = vsel %vm84, %v85, %v83
    %v87 = vrsqrt.pop %v74
    %v88 = vmul.f32 %v87, %v74
    %v89 = vmul.f32 %v88, %v87
    %v90 = vmul.f32 0.5, %v89
    %v91 = vsub.f32 1.5, %v90
    %v92 = vmul.f32 %v87, %v91
    %v93 = vmul.f32 %v74, %v92
    %vm94 = vcmp.eq.f32.partialorder %v74, inf
    %v95 = vsel %vm94, %v74, %v93
    %vm96 = vcmp.eq.f32.partialorder %v74, 0.0
    %v97 = vand.u32 %v74, 2147483648
    %v98 = vsel %vm96, %v97, %v95
    %v99 = vadd.f32 %v86, 1e-06
    %v100 = vadd.f32 %v98, 1e-06
    %v101 = vrcp.pop %v99
    %v102 = vmul.f32 %v99, %v101
    %v103 = vsub.f32 1.0, %v102
    %v104 = vmul.f32 %v101, %v103
    %v105 = vadd.f32 %v101, %v104
    %vm106 = vweird.f32 %v99
    %vm107 = vweird.f32 %v101
    %vm108 = vmor %vm106, %vm107
    %v109 = vsel %vm108, %v101, %v105
    %v110 = vand.u32 2147483647, %v99
    %vm111 = vcmp.eq.f32.partialorder %v110, 8.507059e+37
    %v112 = vand.u32 %v99, 2147483648
    %v113 = vor.u32 1.1754944e-38, %v112
    %v114 = vsel %vm111, %v113, %v109
    %v115 = vrcp.pop %v100
    %v116 = vmul.f32 %v100, %v115
    %v117 = vsub.f32 1.0, %v116
    %v118 = vmul.f32 %v115, %v117
    %v119 = vadd.f32 %v115, %v118
    %vm120 = vweird.f32 %v100
    %vm121 = vweird.f32 %v115
    %vm122 = vmor %vm120, %vm121
    %v123 = vsel %vm122, %v115, %v119
    %v124 = vand.u32 2147483647, %v100
    %vm125 = vcmp.eq.f32.partialorder %v124, 8.507059e+37
    %v126 = vand.u32 %v100, 2147483648
    %v127 = vor.u32 1.1754944e-38, %v126
    %v128 = vsel %vm125, %v127, %v123
    %v129 = vld [vmem:[#allocation5] sm:$0x1]
    %v130 = vld [vmem:[%s2] sm:$0x1]
    %v131 = vmul.f32 %v63, %v114
    %v132 = vmul.f32 %v64, %v128
    %v134 = vperm.slane %v129, 0
    %v136 = vmul.f32 %v134, %v131
    %v137 = vmul.f32 %v134, %v132
    %v139 = vperm.slane %v130, 0
    %v141 = vadd.f32 %v136, %v139
    %v142 = vadd.f32 %v137, %v139
    %143 = vst.msk [vmem:[#allocation7] sm:$0xff] %vm47, %v141
    %144 = vst.msk [vmem:[#allocation7 + $0x8] sm:$0xff] %vm47, %v142
    // Predicated region
    $region22: #{tpu_custom_call.1} parent=1 // pred_check
      _
    $region23: #{tpu_custom_call.1} parent=1 // pred_check_branch
      %146 = sbr.rel (0) target = $region25
    $region24: #{tpu_custom_call.1} parent=1 // pred_region
      %148 = vsyncadd [#allocation4], 0
      %s149 = sshll.u32 [#allocation7], 4
      %s150 = int_to_ptr.vmem [resolvable:$true] %s149
      %s151 = sshll.u32 %s3, 4
      %s152 = int_to_ptr.hbm [resolvable:$true] %s151
      %157 = dma.vmem_to_hbm [thread:$0]  %s150, 256, %s152, [#allocation4], 128, 128, 8
    $region25: #{tpu_custom_call.1} parent=1 // pred_fallthru
      _
    // Predicated region
    $region26: #{tpu_custom_call.1} parent=1 // pred_check
      _
    $region27: #{tpu_custom_call.1} parent=1 // pred_check_branch
      %159 = sbr.rel (0) target = $region29
    $region28: #{tpu_custom_call.1} parent=1 // pred_region
      %161 = dma.done [#allocation4], 256
    $region29: #{tpu_custom_call.1} parent=1 // pred_fallthru
      _
    %162 = vsyncpa [#allocation3], 1
    %163 = vsyncpa [#allocation6], 1
    %164 = vsyncpa [#allocation4], 1

</llo_original>
